<compile_context>
chip_gen: v6e
topology: v6e:2x2x1
jax: 0.10.0
libtpu: 0.0.40
codegen_flags: <defaults>
</compile_context>

<pallas_src>
import jax
import jax.numpy as jnp
from jax.experimental import pallas as pl
from jax.experimental.pallas import tpu as pltpu

LANE = 128


def _round_up(x, m):
    return (x + m - 1) // m * m


def dueling_dqn_kernel(state_ref, w1_ref, b1_ref, w2_ref, b2_ref,
                       wq_ref, bq_ref, q_ref):
    # fc1 + relu (f32 accumulation, f32 epilogue)
    h1 = jnp.dot(state_ref[...], w1_ref[...], preferred_element_type=jnp.float32)
    h1 = jnp.maximum(h1 + b1_ref[...], 0.0)

    # fc2 + relu
    h2 = jnp.dot(h1.astype(w2_ref.dtype), w2_ref[...],
                 preferred_element_type=jnp.float32)
    h2 = jnp.maximum(h2 + b2_ref[...], 0.0)

    # folded dueling head: q = h2 @ W_q + b_q  (exactly value + adv - mean(adv))
    q = jnp.dot(h2.astype(wq_ref.dtype), wq_ref[...],
                preferred_element_type=jnp.float32)
    q_ref[...] = q + bq_ref[...]


def fold_and_pad_params(raw, *, weight_dtype=jnp.bfloat16, lane=LANE):
    """Fold the dueling head into one matmul and lane-pad everything to 128.

    raw weights are stored (in, out); biases (1, out). The fold is exact:
      value + adv - mean(adv) = h2 @ (wa + wv - mean(wa)) + (ba + bv - mean(ba))
    Padding uses zero rows/cols, so padded lanes stay exactly zero through
    ReLU and the final matmul.
    """
    w1, b1 = raw["w1"], raw["b1"]        # (in, f1), (1, f1)
    w2, b2 = raw["w2"], raw["b2"]        # (f1, f2), (1, f2)
    wv, bv = raw["wv"], raw["bv"]        # (f2, 1), (1, 1)
    wa, ba = raw["wa"], raw["ba"]        # (f2, A), (1, A)

    num_actions = wa.shape[1]
    wq = wa + wv - jnp.mean(wa, axis=1, keepdims=True)      # (f2, A)
    bq = ba + bv - jnp.mean(ba, axis=1, keepdims=True)      # (1, A)

    f1 = w1.shape[1]
    f2 = w2.shape[1]
    f1p = _round_up(f1, lane)
    f2p = _round_up(f2, lane)
    ap = _round_up(num_actions, lane)

    def pad2(x, rows, cols):
        return jnp.pad(x, ((0, rows - x.shape[0]), (0, cols - x.shape[1])))

    return {
        "num_actions": num_actions,
        # MXU operands in weight_dtype (bf16 by default)
        "w1": pad2(w1, w1.shape[0], f1p).astype(weight_dtype),
        "w2": pad2(w2, f1p, f2p).astype(weight_dtype),
        "wq": pad2(wq, f2p, ap).astype(weight_dtype),
        # bias / epilogue stays f32
        "b1": pad2(b1, 1, f1p).astype(jnp.float32),
        "b2": pad2(b2, 1, f2p).astype(jnp.float32),
        "bq": pad2(bq, 1, ap).astype(jnp.float32),
    }


def dueling_dqn_forward(state, p, *, tb_max=512):
    """state: (B, input_dim) f32. p: output of fold_and_pad_params."""
    B, in_dim = state.shape
    A = p["num_actions"]
    out_pad = p["wq"].shape[1]

    # Batch tile: multiple of 16 (bf16 sublane-safe), capped at tb_max.
    tb = min(tb_max, _round_up(B, 16))
    b_pad = _round_up(B, tb)
    if b_pad != B:
        state = jnp.pad(state, ((0, b_pad - B), (0, 0)))
    state = state.astype(p["w1"].dtype)

    grid = (b_pad // tb,)
    # Weights: full-array blocks, constant index_map -> VMEM-resident.
    resident = lambda shape: pl.BlockSpec(shape, lambda i: (0, 0))

    q_pad = pl.pallas_call(
        dueling_dqn_kernel,
        out_shape=jax.ShapeDtypeStruct((b_pad, out_pad), jnp.float32),
        grid=grid,
        in_specs=[
            pl.BlockSpec((tb, in_dim), lambda i: (i, 0)),   # streamed state
            resident(p["w1"].shape), resident(p["b1"].shape),
            resident(p["w2"].shape), resident(p["b2"].shape),
            resident(p["wq"].shape), resident(p["bq"].shape),
        ],
        out_specs=pl.BlockSpec((tb, out_pad), lambda i: (i, 0)),
        compiler_params=pltpu.CompilerParams(
            dimension_semantics=("parallel",)),
    )(state, p["w1"], p["b1"], p["w2"], p["b2"], p["wq"], p["bq"])

    return q_pad[:B, :A]


def init_params(key, input_dim, output_dim, fc1_dims=64, fc2_dims=64):
    """Deterministic synthetic parameters. Weights stored as (in, out)."""
    ks = jax.random.split(key, 8)

    def uniform(k, shape, fan_in):
        bound = 1.0 / jnp.sqrt(fan_in)
        return jax.random.uniform(k, shape, jnp.float32, -bound, bound)

    return {
        "w1": uniform(ks[0], (input_dim, fc1_dims), input_dim),
        "b1": uniform(ks[1], (1, fc1_dims), input_dim),
        "w2": uniform(ks[2], (fc1_dims, fc2_dims), fc1_dims),
        "b2": uniform(ks[3], (1, fc2_dims), fc1_dims),
        "wv": uniform(ks[4], (fc2_dims, 1), fc2_dims),
        "bv": uniform(ks[5], (1, 1), fc2_dims),
        "wa": uniform(ks[6], (fc2_dims, output_dim), fc2_dims),
        "ba": uniform(ks[7], (1, output_dim), fc2_dims),
    }


def reference_forward(state, p):
    """Pure-JAX f32 reference using the UNFOLDED dueling head."""
    h1 = jnp.maximum(state @ p["w1"] + p["b1"], 0.0)
    h2 = jnp.maximum(h1 @ p["w2"] + p["b2"], 0.0)
    value = h2 @ p["wv"] + p["bv"]
    adv = h2 @ p["wa"] + p["ba"]
    return value + (adv - adv.mean(axis=1, keepdims=True))


if __name__ == "__main__":
    key = jax.random.PRNGKey(0)
    k_state, k_params = jax.random.split(key)

    batch, input_dim, output_dim = 100, 16, 8   # non-multiple batch: exercises
                                                # pad + 2-step grid with tb=64

    state = jax.random.normal(k_state, (batch, input_dim), dtype=jnp.float32)
    raw = init_params(k_params, input_dim, output_dim)
    q_ref = reference_forward(state, raw)

    # 1) f32 weights: verifies the head-fold + zero-padding is numerically exact.
    p_f32 = fold_and_pad_params(raw, weight_dtype=jnp.float32)
    q_f32 = jax.block_until_ready(dueling_dqn_forward(state, p_f32, tb_max=64))
    assert q_f32.shape == (batch, output_dim)
    assert jnp.allclose(q_f32, q_ref, atol=1e-5, rtol=1e-5), "f32 mismatch vs reference"

    # 2) bf16 weights/activations (production MXU path): looser tolerance.
    p_bf16 = fold_and_pad_params(raw, weight_dtype=jnp.bfloat16)
    q_bf16 = jax.block_until_ready(dueling_dqn_forward(state, p_bf16, tb_max=64))
    assert q_bf16.shape == (batch, output_dim)
    assert jnp.allclose(q_bf16, q_ref, atol=5e-2, rtol=5e-2), "bf16 mismatch vs reference"

    print("KERNEL_OK")
</pallas_src>

<mosaic_0001>
module attributes {stable_mosaic.version = 11 : i64} {
  func.func @dueling_dqn_kernel(%arg0: i32, %arg1: memref<64x16xf32, #tpu.memory_space<vmem>>, %arg2: memref<16x128xf32, #tpu.memory_space<vmem>>, %arg3: memref<1x128xf32, #tpu.memory_space<vmem>>, %arg4: memref<128x128xf32, #tpu.memory_space<vmem>>, %arg5: memref<1x128xf32, #tpu.memory_space<vmem>>, %arg6: memref<128x128xf32, #tpu.memory_space<vmem>>, %arg7: memref<1x128xf32, #tpu.memory_space<vmem>>, %arg8: memref<64x128xf32, #tpu.memory_space<vmem>>) attributes {dimension_semantics = [#tpu.dimension_semantics<parallel>], iteration_bounds = array<i64: 2>, scalar_prefetch = 0 : i64, scratch_operands = 0 : i64, tpu.core_type = #tpu.core_type<tc>, window_params = [{transform_indices = @transform_0, window_bounds = array<i64: 64, 16>}, {pipeline_mode = #tpu.pipeline_mode<synchronous>, transform_indices = @transform_1, window_bounds = array<i64: 16, 128>}, {pipeline_mode = #tpu.pipeline_mode<synchronous>, transform_indices = @transform_2, window_bounds = array<i64: 1, 128>}, {pipeline_mode = #tpu.pipeline_mode<synchronous>, transform_indices = @transform_3, window_bounds = array<i64: 128, 128>}, {pipeline_mode = #tpu.pipeline_mode<synchronous>, transform_indices = @transform_4, window_bounds = array<i64: 1, 128>}, {pipeline_mode = #tpu.pipeline_mode<synchronous>, transform_indices = @transform_5, window_bounds = array<i64: 128, 128>}, {pipeline_mode = #tpu.pipeline_mode<synchronous>, transform_indices = @transform_6, window_bounds = array<i64: 1, 128>}, {transform_indices = @transform_7, window_bounds = array<i64: 64, 128>}]} {
    %c0 = arith.constant 0 : index
    %c0_0 = arith.constant 0 : index
    %0 = vector.load %arg1[%c0, %c0_0] : memref<64x16xf32, #tpu.memory_space<vmem>>, vector<64x16xf32>
    %c0_1 = arith.constant 0 : index
    %c0_2 = arith.constant 0 : index
    %1 = vector.load %arg2[%c0_1, %c0_2] : memref<16x128xf32, #tpu.memory_space<vmem>>, vector<16x128xf32>
    %cst = arith.constant dense<0.000000e+00> : vector<64x128xf32>
    %2 = tpu.matmul %0, %1, %cst {dimension_numbers = #tpu.dot_dimension_numbers<[1], [0], [0], [1], [0, 0, 1, 1], [], []>} : vector<64x16xf32>, vector<16x128xf32>, vector<64x128xf32> -> vector<64x128xf32>
    %c0_3 = arith.constant 0 : index
    %c0_4 = arith.constant 0 : index
    %3 = vector.load %arg3[%c0_3, %c0_4] : memref<1x128xf32, #tpu.memory_space<vmem>>, vector<1x128xf32>
    %4 = vector.broadcast %3 : vector<1x128xf32> to vector<64x128xf32>
    %5 = arith.addf %2, %4 : vector<64x128xf32>
    %cst_5 = arith.constant 0.000000e+00 : f32
    %6 = vector.broadcast %cst_5 : f32 to vector<64x128xf32>
    %7 = arith.maximumf %5, %6 : vector<64x128xf32>
    %c0_6 = arith.constant 0 : index
    %c0_7 = arith.constant 0 : index
    %8 = vector.load %arg4[%c0_6, %c0_7] : memref<128x128xf32, #tpu.memory_space<vmem>>, vector<128x128xf32>
    %cst_8 = arith.constant dense<0.000000e+00> : vector<64x128xf32>
    %9 = tpu.matmul %7, %8, %cst_8 {dimension_numbers = #tpu.dot_dimension_numbers<[1], [0], [0], [1], [0, 0, 1, 1], [], []>} : vector<64x128xf32>, vector<128x128xf32>, vector<64x128xf32> -> vector<64x128xf32>
    %c0_9 = arith.constant 0 : index
    %c0_10 = arith.constant 0 : index
    %10 = vector.load %arg5[%c0_9, %c0_10] : memref<1x128xf32, #tpu.memory_space<vmem>>, vector<1x128xf32>
    %11 = vector.broadcast %10 : vector<1x128xf32> to vector<64x128xf32>
    %12 = arith.addf %9, %11 : vector<64x128xf32>
    %cst_11 = arith.constant 0.000000e+00 : f32
    %13 = vector.broadcast %cst_11 : f32 to vector<64x128xf32>
    %14 = arith.maximumf %12, %13 : vector<64x128xf32>
    %c0_12 = arith.constant 0 : index
    %c0_13 = arith.constant 0 : index
    %15 = vector.load %arg6[%c0_12, %c0_13] : memref<128x128xf32, #tpu.memory_space<vmem>>, vector<128x128xf32>
    %cst_14 = arith.constant dense<0.000000e+00> : vector<64x128xf32>
    %16 = tpu.matmul %14, %15, %cst_14 {dimension_numbers = #tpu.dot_dimension_numbers<[1], [0], [0], [1], [0, 0, 1, 1], [], []>} : vector<64x128xf32>, vector<128x128xf32>, vector<64x128xf32> -> vector<64x128xf32>
    %c0_15 = arith.constant 0 : index
    %c0_16 = arith.constant 0 : index
    %17 = vector.load %arg7[%c0_15, %c0_16] : memref<1x128xf32, #tpu.memory_space<vmem>>, vector<1x128xf32>
    %18 = vector.broadcast %17 : vector<1x128xf32> to vector<64x128xf32>
    %19 = arith.addf %16, %18 : vector<64x128xf32>
    %c0_17 = arith.constant 0 : index
    %c0_18 = arith.constant 0 : index
    %20 = vector.load %arg8[%c0_17, %c0_18] : memref<64x128xf32, #tpu.memory_space<vmem>>, vector<64x128xf32>
    tpu.vector_store %arg8[%c0_17, %c0_18], %19 {strides = array<i32>} : memref<64x128xf32, #tpu.memory_space<vmem>>, vector<64x128xf32>,
    return
  }
  func.func @transform_0(%arg0: i32) -> (i32, i32) {
    %c0_i32 = arith.constant 0 : i32
    %c0_i32_0 = arith.constant 0 : i32
    return %arg0, %c0_i32 : i32, i32
  }
  func.func @transform_1(%arg0: i32) -> (i32, i32) {
    %c0_i32 = arith.constant 0 : i32
    %c0_i32_0 = arith.constant 0 : i32
    %c0_i32_1 = arith.constant 0 : i32
    return %c0_i32, %c0_i32_0 : i32, i32
  }
  func.func @transform_2(%arg0: i32) -> (i32, i32) {
    %c0_i32 = arith.constant 0 : i32
    %c0_i32_0 = arith.constant 0 : i32
    %c0_i32_1 = arith.constant 0 : i32
    return %c0_i32, %c0_i32_0 : i32, i32
  }
  func.func @transform_3(%arg0: i32) -> (i32, i32) {
    %c0_i32 = arith.constant 0 : i32
    %c0_i32_0 = arith.constant 0 : i32
    %c0_i32_1 = arith.constant 0 : i32
    return %c0_i32, %c0_i32_0 : i32, i32
  }
  func.func @transform_4(%arg0: i32) -> (i32, i32) {
    %c0_i32 = arith.constant 0 : i32
    %c0_i32_0 = arith.constant 0 : i32
    %c0_i32_1 = arith.constant 0 : i32
    return %c0_i32, %c0_i32_0 : i32, i32
  }
  func.func @transform_5(%arg0: i32) -> (i32, i32) {
    %c0_i32 = arith.constant 0 : i32
    %c0_i32_0 = arith.constant 0 : i32
    %c0_i32_1 = arith.constant 0 : i32
    return %c0_i32, %c0_i32_0 : i32, i32
  }
  func.func @transform_6(%arg0: i32) -> (i32, i32) {
    %c0_i32 = arith.constant 0 : i32
    %c0_i32_0 = arith.constant 0 : i32
    %c0_i32_1 = arith.constant 0 : i32
    return %c0_i32, %c0_i32_0 : i32, i32
  }
  func.func @transform_7(%arg0: i32) -> (i32, i32) {
    %c0_i32 = arith.constant 0 : i32
    %c0_i32_0 = arith.constant 0 : i32
    return %arg0, %c0_i32 : i32, i32
  }
}

</mosaic_0001>

<llo_original>
// kernel: tpu_custom_call.1
$region0: #{tpu_custom_call.1}
  #allocation0 [shape = 'u32[]', space=smem, size = 0x4, offset = 0x4, fixed_abs, tag = 'smem constant byte address 0x4 - core index']
  #allocation1 [shape = 'u32[144,128]{1,0:T(1,128)}', space=vmem, size = 0x12000, scoped, tag = 'internal scratch']
  %s0 = inlined_call_operand.vmem [shape: f32[128,16], index: 0, kind: input, shape index: {}]
  %s1 = inlined_call_operand.vmem [shape: f32[16,128], index: 1, kind: input, shape index: {}]
  %s2 = inlined_call_operand.vmem [shape: f32[1,128], index: 2, kind: input, shape index: {}]
  %s3 = inlined_call_operand.vmem [shape: f32[128,128], index: 3, kind: input, shape index: {}]
  %s4 = inlined_call_operand.vmem [shape: f32[1,128], index: 4, kind: input, shape index: {}]
  %s5 = inlined_call_operand.hbm [shape: f32[128,128], index: 5, kind: input, shape index: {}]
  %s6 = inlined_call_operand.vmem [shape: f32[1,128], index: 6, kind: input, shape index: {}]
  %s7 = inlined_call_operand.hbm [shape: f32[128,128], index: 7, kind: output, shape index: {}]
  %s8 = sld [smem:[#allocation0]]
  $region65: #{tpu_custom_call.1} parent=0
    _
  %s10 = ssub.s32 1, %s8
  %s11 = scalar_select 0, %s10, %s8
  $region1: #{tpu_custom_call.1} parent=0
    #allocation2 [shape = 'u8[65536]{0}', space=vmem, size = 0x10000, scoped, tag = 'input window, operand 5, single buffered']
    #allocation3 [shape = 's32[2]{0}', space=sflag, size = 0x8, scoped, tag = 'scoped memory for tpu_custom_call.1']
    #allocation4 [shape = 's32[2]{0}', space=sflag, size = 0x8, scoped, tag = 'scoped memory for tpu_custom_call.1']
    #allocation5 [shape = 'u8[65536]{0}', space=vmem, size = 0x10000, scoped, tag = 'output window, operand 0']
    %12 = vsyncpa [#allocation3], 0
    %13 = vsyncpa [#allocation4], 0
    %s14 = scalar_lea.sflag [#allocation4], 1
    %15 = vsyncpa %s14, 0
    loop: start=0, step=1, limit=4
    $region2: #{tpu_custom_call.1} parent=1 // loop_pre_header
      _
    $region3: #{tpu_custom_call.1} parent=1 // loop_header
      %s17 = sphi 0, %s21
      %p18 = scmp.ge.s32.totalorder %s17, 4
      %s27 = sphi 0, %s29
      %s30 = sphi 0, %s27
      %s31 = sphi 0, %s30
      %s47 = sphi 0, %s31
      %s51 = sphi 0, %s51
      %s53 = sphi 0, %s51
      %s54 = sphi 0, %s53
      %s68 = sphi 0, %s54
      %s72 = sphi 0, %s72
      %s74 = sphi 0, %s72
      %s75 = sphi 0, %s74
      %s89 = sphi 0, %s75
      %s93 = sphi 0, %s93
      %s95 = sphi 0, %s93
      %s96 = sphi 0, %s95
      %s110 = sphi 0, %s96
      %s114 = sphi 0, %s114
      %s116 = sphi 0, %s114
      %s117 = sphi 0, %s116
      %s131 = sphi 0, %s117
      %s135 = sphi 0, %s135
      %s137 = sphi 0, %s135
      %s138 = sphi 0, %s137
      %s152 = sphi 0, %s138
      %s156 = sphi 0, %s156
      %s158 = sphi 0, %s156
      %s159 = sphi 0, %s158
      %s173 = sphi 0, %s159
      %s179 = sphi 0, %s181
      %s182 = sphi 0, %s179
      %s183 = sphi 0, %s182
      %s199 = sphi 0, %s183
    $region4: #{tpu_custom_call.1} parent=1 // loop_header_branch
      %20 = sbr.rel (%p18) target = $region8
    $region5: #{tpu_custom_call.1} parent=1 // loop_body
      %s22 = ssub.s32 %s17, 1
      %s23 = ssub.s32 %s17, 2
      %s24 = sadd.s32 %s17, 1
      %s25 = ssub.s32 %s17, %s24
      %p26 = scmp.eq.s32.totalorder %s25, 0
      %s28 = sadd.s32 %s27, 1
      %s29 = scalar_select %p26, %s27, %s28
      %p32 = pneg %p26
      %p33 = scmp.eq.s32.totalorder %s17, 1
      %p34 = por %p32, %p33
      %p35 = scmp.ne.s32.totalorder %s27, %s30
      %p36 = scmp.eq.s32.totalorder %s17, 0
      %p37 = por %p35, %p36
      %p38 = scmp.ne.s32.totalorder %s27, %s30
      %p39 = scmp.eq.s32.totalorder %s22, 1
      %p40 = por %p38, %p39
      %p41 = scmp.ne.s32.totalorder %s30, %s31
      %p42 = scmp.eq.s32.totalorder %s22, 0
      %p43 = por %p41, %p42
      %p44 = scmp.ne.s32.totalorder %s30, %s31
      %p45 = scmp.eq.s32.totalorder %s23, 1
      %p46 = por %p44, %p45
      %p48 = scmp.ne.s32.totalorder %s31, %s47
      %p49 = scmp.eq.s32.totalorder %s23, 0
      %p50 = por %p48, %p49
      %s52 = sadd.s32 %s51, 1
      %p55 = scmp.eq.s32.totalorder %s17, 1
      %p56 = scmp.ne.s32.totalorder %s51, %s53
      %p57 = scmp.eq.s32.totalorder %s17, 0
      %p58 = por %p56, %p57
      %p59 = scmp.ne.s32.totalorder %s51, %s53
      %p60 = scmp.eq.s32.totalorder %s22, 1
      %p61 = por %p59, %p60
      %p62 = scmp.ne.s32.totalorder %s53, %s54
      %p63 = scmp.eq.s32.totalorder %s22, 0
      %p64 = por %p62, %p63
      %p65 = scmp.ne.s32.totalorder %s53, %s54
      %p66 = scmp.eq.s32.totalorder %s23, 1
      %p67 = por %p65, %p66
      %p69 = scmp.ne.s32.totalorder %s54, %s68
      %p70 = scmp.eq.s32.totalorder %s23, 0
      %p71 = por %p69, %p70
      %s73 = sadd.s32 %s72, 1
      %p76 = scmp.eq.s32.totalorder %s17, 1
      %p77 = scmp.ne.s32.totalorder %s72, %s74
      %p78 = scmp.eq.s32.totalorder %s17, 0
      %p79 = por %p77, %p78
      %p80 = scmp.ne.s32.totalorder %s72, %s74
      %p81 = scmp.eq.s32.totalorder %s22, 1
      %p82 = por %p80, %p81
      %p83 = scmp.ne.s32.totalorder %s74, %s75
      %p84 = scmp.eq.s32.totalorder %s22, 0
      %p85 = por %p83, %p84
      %p86 = scmp.ne.s32.totalorder %s74, %s75
      %p87 = scmp.eq.s32.totalorder %s23, 1
      %p88 = por %p86, %p87
      %p90 = scmp.ne.s32.totalorder %s75, %s89
      %p91 = scmp.eq.s32.totalorder %s23, 0
      %p92 = por %p90, %p91
      %s94 = sadd.s32 %s93, 1
      %p97 = scmp.eq.s32.totalorder %s17, 1
      %p98 = scmp.ne.s32.totalorder %s93, %s95
      %p99 = scmp.eq.s32.totalorder %s17, 0
      %p100 = por %p98, %p99
      %p101 = scmp.ne.s32.totalorder %s93, %s95
      %p102 = scmp.eq.s32.totalorder %s22, 1
      %p103 = por %p101, %p102
      %p104 = scmp.ne.s32.totalorder %s95, %s96
      %p105 = scmp.eq.s32.totalorder %s22, 0
      %p106 = por %p104, %p105
      %p107 = scmp.ne.s32.totalorder %s95, %s96
      %p108 = scmp.eq.s32.totalorder %s23, 1
      %p109 = por %p107, %p108
      %p111 = scmp.ne.s32.totalorder %s96, %s110
      %p112 = scmp.eq.s32.totalorder %s23, 0
      %p113 = por %p111, %p112
      %s115 = sadd.s32 %s114, 1
      %p118 = scmp.eq.s32.totalorder %s17, 1
      %p119 = scmp.ne.s32.totalorder %s114, %s116
      %p120 = scmp.eq.s32.totalorder %s17, 0
      %p121 = por %p119, %p120
      %p122 = scmp.ne.s32.totalorder %s114, %s116
      %p123 = scmp.eq.s32.totalorder %s22, 1
      %p124 = por %p122, %p123
      %p125 = scmp.ne.s32.totalorder %s116, %s117
      %p126 = scmp.eq.s32.totalorder %s22, 0
      %p127 = por %p125, %p126
      %p128 = scmp.ne.s32.totalorder %s116, %s117
      %p129 = scmp.eq.s32.totalorder %s23, 1
      %p130 = por %p128, %p129
      %p132 = scmp.ne.s32.totalorder %s117, %s131
      %p133 = scmp.eq.s32.totalorder %s23, 0
      %p134 = por %p132, %p133
      %s136 = sadd.s32 %s135, 1
      %p139 = scmp.eq.s32.totalorder %s17, 1
      %p140 = scmp.ne.s32.totalorder %s135, %s137
      %p141 = scmp.eq.s32.totalorder %s17, 0
      %p142 = por %p140, %p141
      %p143 = scmp.ne.s32.totalorder %s135, %s137
      %p144 = scmp.eq.s32.totalorder %s22, 1
      %p145 = por %p143, %p144
      %p146 = scmp.ne.s32.totalorder %s137, %s138
      %p147 = scmp.eq.s32.totalorder %s22, 0
      %p148 = por %p146, %p147
      %p149 = scmp.ne.s32.totalorder %s137, %s138
      %p150 = scmp.eq.s32.totalorder %s23, 1
      %p151 = por %p149, %p150
      %p153 = scmp.ne.s32.totalorder %s138, %s152
      %p154 = scmp.eq.s32.totalorder %s23, 0
      %p155 = por %p153, %p154
      %s157 = sadd.s32 %s156, 1
      %p160 = scmp.eq.s32.totalorder %s17, 1
      %p161 = scmp.ne.s32.totalorder %s156, %s158
      %p162 = scmp.eq.s32.totalorder %s17, 0
      %p163 = por %p161, %p162
      %p164 = scmp.ne.s32.totalorder %s156, %s158
      %p165 = scmp.eq.s32.totalorder %s22, 1
      %p166 = por %p164, %p165
      %p167 = scmp.ne.s32.totalorder %s158, %s159
      %p168 = scmp.eq.s32.totalorder %s22, 0
      %p169 = por %p167, %p168
      %p170 = scmp.ne.s32.totalorder %s158, %s159
      %p171 = scmp.eq.s32.totalorder %s23, 1
      %p172 = por %p170, %p171
      %p174 = scmp.ne.s32.totalorder %s159, %s173
      %p175 = scmp.eq.s32.totalorder %s23, 0
      %p176 = por %p174, %p175
      %s177 = ssub.s32 %s17, %s24
      %p178 = scmp.eq.s32.totalorder %s177, 0
      %s180 = sadd.s32 %s179, 1
      %s181 = scalar_select %p178, %s179, %s180
      %p184 = pneg %p178
      %p185 = scmp.eq.s32.totalorder %s17, 1
      %p186 = por %p184, %p185
      %p187 = scmp.ne.s32.totalorder %s179, %s182
      %p188 = scmp.eq.s32.totalorder %s17, 0
      %p189 = por %p187, %p188
      %p190 = scmp.ne.s32.totalorder %s179, %s182
      %p191 = scmp.eq.s32.totalorder %s22, 1
      %p192 = por %p190, %p191
      %p193 = scmp.ne.s32.totalorder %s182, %s183
      %p194 = scmp.eq.s32.totalorder %s22, 0
      %p195 = por %p193, %p194
      %p196 = scmp.ne.s32.totalorder %s182, %s183
      %p197 = scmp.eq.s32.totalorder %s23, 1
      %p198 = por %p196, %p197
      %p200 = scmp.ne.s32.totalorder %s183, %s199
      %p201 = scmp.eq.s32.totalorder %s23, 0
      %p202 = por %p200, %p201
      %p203 = scmp.le.s32.totalorder 1, %s17
      %p204 = scmp.lt.s32.totalorder %s17, 3
      %p205 = pnand %p203, %p204
      %p206 = pneg %p205
      // Predicated region
      $region9: #{tpu_custom_call.1} parent=5 // pred_check
        _
      $region10: #{tpu_custom_call.1} parent=5 // pred_check_branch
        %208 = sbr.rel (%p205) target = $region12
      $region11: #{tpu_custom_call.1} parent=5 // pred_region
        %s209 = ssub.s32 %s17, 1
        // Predicated region
        $region13: #{tpu_custom_call.1} parent=11 // pred_check
          %p210 = pneg %p64
        $region14: #{tpu_custom_call.1} parent=11 // pred_check_branch
          %212 = sbr.rel (%p210) target = $region16
        $region15: #{tpu_custom_call.1} parent=11 // pred_region
          _
        $region16: #{tpu_custom_call.1} parent=11 // pred_fallthru
          _
        // Predicated region
        $region17: #{tpu_custom_call.1} parent=11 // pred_check
          %p213 = pneg %p85
        $region18: #{tpu_custom_call.1} parent=11 // pred_check_branch
          %215 = sbr.rel (%p213) target = $region20
        $region19: #{tpu_custom_call.1} parent=11 // pred_region
          _
        $region20: #{tpu_custom_call.1} parent=11 // pred_fallthru
          _
        // Predicated region
        $region21: #{tpu_custom_call.1} parent=11 // pred_check
          %p216 = pneg %p106
        $region22: #{tpu_custom_call.1} parent=11 // pred_check_branch
          %218 = sbr.rel (%p216) target = $region24
        $region23: #{tpu_custom_call.1} parent=11 // pred_region
          _
        $region24: #{tpu_custom_call.1} parent=11 // pred_fallthru
          _
        // Predicated region
        $region25: #{tpu_custom_call.1} parent=11 // pred_check
          %p219 = pneg %p127
        $region26: #{tpu_custom_call.1} parent=11 // pred_check_branch
          %221 = sbr.rel (%p219) target = $region28
        $region27: #{tpu_custom_call.1} parent=11 // pred_region
          _
        $region28: #{tpu_custom_call.1} parent=11 // pred_fallthru
          _
        // Predicated region
        $region29: #{tpu_custom_call.1} parent=11 // pred_check
          %p222 = pneg %p148
        $region30: #{tpu_custom_call.1} parent=11 // pred_check_branch
          %224 = sbr.rel (%p222) target = $region32
        $region31: #{tpu_custom_call.1} parent=11 // pred_region
          %s226 = ssub.s32 2048, 2048
          %227 = vsyncadd [#allocation3], %s226
          %s228 = sshll.u32 [#allocation2], 4
          %s229 = int_to_ptr.vmem [resolvable:$true] %s228
          %234 = dma.hbm_to_vmem [thread:$0]  %s5, 2048, %s229, [#allocation3], 128, 128, 8
        $region32: #{tpu_custom_call.1} parent=11 // pred_fallthru
          _
        // Predicated region
        $region33: #{tpu_custom_call.1} parent=11 // pred_check
          %p235 = pneg %p169
        $region34: #{tpu_custom_call.1} parent=11 // pred_check_branch
          %237 = sbr.rel (%p235) target = $region36
        $region35: #{tpu_custom_call.1} parent=11 // pred_region
          _
        $region36: #{tpu_custom_call.1} parent=11 // pred_fallthru
          _
      $region12: #{tpu_custom_call.1} parent=5 // pred_fallthru
        _
      %p238 = scmp.lt.s32.totalorder %s17, 2
      // Predicated region
      $region37: #{tpu_custom_call.1} parent=5 // pred_check
        %p239 = pneg %p238
      $region38: #{tpu_custom_call.1} parent=5 // pred_check_branch
        %241 = sbr.rel (%p239) target = $region40
      $region39: #{tpu_custom_call.1} parent=5 // pred_region
        // Predicated region
        $region41: #{tpu_custom_call.1} parent=39 // pred_check
          %p242 = pneg %p37
        $region42: #{tpu_custom_call.1} parent=39 // pred_check_branch
          %244 = sbr.rel (%p242) target = $region44
        $region43: #{tpu_custom_call.1} parent=39 // pred_region
          %s245 = smul.u32 8, %s17
          %p246 = scmp.lt.s32.totalorder %s245, 15
          %s247 = scalar_select %p246, %s245, 15
          %s248 = smul.addr %s247, 8
          %s249 = scalar_lea.vmem %s0, %s248
          %s250 = smul.u32 8, %s17
        $region44: #{tpu_custom_call.1} parent=39 // pred_fallthru
          _
      $region40: #{tpu_custom_call.1} parent=5 // pred_fallthru
        _
      %p251 = scmp.le.s32.totalorder 1, %s17
      %p252 = scmp.lt.s32.totalorder %s17, 3
      %p253 = pnand %p251, %p252
      %p254 = pneg %p253
      // Predicated region
      $region45: #{tpu_custom_call.1} parent=5 // pred_check
        _
      $region46: #{tpu_custom_call.1} parent=5 // pred_check_branch
        %256 = sbr.rel (%p253) target = $region48
      $region47: #{tpu_custom_call.1} parent=5 // pred_region
        %s257 = ssub.s32 %s17, 1
        // Predicated region
        $region49: #{tpu_custom_call.1} parent=47 // pred_check
          %p258 = pneg %p148
        $region50: #{tpu_custom_call.1} parent=47 // pred_check_branch
          %260 = sbr.rel (%p258) target = $region52
        $region51: #{tpu_custom_call.1} parent=47 // pred_region
          %261 = dma.done [#allocation3], 2048
        $region52: #{tpu_custom_call.1} parent=47 // pred_fallthru
          _
        %s262 = smul.u32 8, %s22
        %p263 = scmp.lt.s32.totalorder %s262, 15
        %s264 = scalar_select %p263, %s262, 15
        %s265 = smul.addr %s264, 8
        %s266 = scalar_lea.vmem %s0, %s265
        %p267 = pneg %p43
        %p268 = pneg %p40
        %p269 = pneg %p64
        %p270 = pneg %p61
        %p271 = pneg %p85
        %p272 = pneg %p82
        %p273 = pneg %p106
        %p274 = pneg %p103
        %p275 = pneg %p127
        %p276 = pneg %p124
        %p277 = pneg %p148
        %p278 = pneg %p145
        %p279 = pneg %p169
        %p280 = pneg %p166
        %p281 = pneg %p195
        %p282 = pneg %p192
        %s283 = sand.u32 %s182, 1
        %s284 = scalar_lea.sflag [#allocation4], %s283
        %s285 = sand.u32 %s182, 1
        %s286 = smul.addr %s285, 64
        %s287 = scalar_lea.vmem [#allocation5], %s286
        %s288 = smul.u32 8, %s22
        %p289 = scmp.lt.s32.totalorder %s288, 15
        %s290 = scalar_select %p289, %s288, 15
        %s291 = smul.addr %s290, 8
        %s292 = scalar_lea.vmem %s0, %s291
        %s293 = smul.u32 8, %s22
        %s294 = smul.u32 8, %s22
        %v295 = vld [vmem:[%s292] sm:$0xff]
        %v296 = vld [vmem:[%s292 + $0x8] sm:$0xff]
        %v297 = vld [vmem:[%s292 + $0x10] sm:$0xff]
        %v298 = vld [vmem:[%s292 + $0x18] sm:$0xff]
        %v299 = vld [vmem:[%s292 + $0x20] sm:$0xff]
        %v300 = vld [vmem:[%s292 + $0x28] sm:$0xff]
        %v301 = vld [vmem:[%s292 + $0x30] sm:$0xff]
        %v302 = vld [vmem:[%s292 + $0x38] sm:$0xff]
        %v303 = vld [vmem:[%s1] sm:$0xff]
        %v304 = vld [vmem:[%s1 + $0x8] sm:$0xff]
        %v305 = vld [vmem:[%s2] sm:$0x1]
        %v307 = vlaneseq
        %v308 = vshrl.u32 %v307, 7
        %v309 = vsub.s32 0, %v308
        %v310 = vrot.slane %v305, %v309
        %vm312 = vcmask 130048
        %v314 = vsel %vm312, %v295, 0
        %v317 = vsel %vm312, %v296, 0
        %v320 = vsel %vm312, %v297, 0
        %v323 = vsel %vm312, %v298, 0
        %v326 = vsel %vm312, %v299, 0
        %v329 = vsel %vm312, %v300, 0
        %v332 = vsel %vm312, %v301, 0
        %v335 = vsel %vm312, %v302, 0
        %337 = vmatprep.subr.mxu0 0.0
        %338 = vmatpush1.msra.mxu0 0.0
        %339 = vmatprep.subr.mxu0 0.0
        %340 = vmatpush1.msra.mxu0 0.0
        %341 = vmatprep.subr.mxu0 0.0
        %342 = vmatpush1.msra.mxu0 0.0
        %343 = vmatprep.subr.mxu0 0.0
        %344 = vmatpush1.msra.mxu0 0.0
        %345 = vmatprep.subr.mxu0 0.0
        %346 = vmatpush1.msra.mxu0 0.0
        %347 = vmatprep.subr.mxu0 0.0
        %348 = vmatpush1.msra.mxu0 0.0
        %349 = vmatprep.subr.mxu0 0.0
        %350 = vmatpush1.msra.mxu0 0.0
        %351 = vmatprep.subr.mxu0 0.0
        %352 = vmatpush1.msra.mxu0 0.0
        %353 = vmatprep.subr.mxu0 0.0
        %354 = vmatpush1.msra.mxu0 0.0
        %355 = vmatprep.subr.mxu0 0.0
        %356 = vmatpush1.msra.mxu0 0.0
        %357 = vmatprep.subr.mxu0 0.0
        %358 = vmatpush1.msra.mxu0 0.0
        %359 = vmatprep.subr.mxu0 0.0
        %360 = vmatpush1.msra.mxu0 0.0
        %361 = vmatprep.subr.mxu0 0.0
        %362 = vmatpush1.msra.mxu0 0.0
        %363 = vmatprep.subr.mxu0 0.0
        %364 = vmatpush1.msra.mxu0 0.0
        %365 = vmatprep.subr.mxu0 0.0
        %366 = vmatpush1.msra.mxu0 %v304
        %367 = vmatprep.subr.mxu0 0.0
        %368 = vmatpush1.msra.mxu0 %v303
        %369 = vmatprep.subr.mxu0 0.0
        %370 = vmatpush2.msra.mxu0 0.0
        %371 = vmatprep.subr.mxu0 0.0
        %372 = vmatpush2.msra.mxu0 0.0
        %373 = vmatprep.subr.mxu0 0.0
        %374 = vmatpush2.msra.mxu0 0.0
        %375 = vmatprep.subr.mxu0 0.0
        %376 = vmatpush2.msra.mxu0 0.0
        %377 = vmatprep.subr.mxu0 0.0
        %378 = vmatpush2.msra.mxu0 0.0
        %379 = vmatprep.subr.mxu0 0.0
        %380 = vmatpush2.msra.mxu0 0.0
        %381 = vmatprep.subr.mxu0 0.0
        %382 = vmatpush2.msra.mxu0 0.0
        %383 = vmatprep.subr.mxu0 0.0
        %384 = vmatpush2.msra.mxu0 0.0
        %385 = vmatprep.subr.mxu0 0.0
        %386 = vmatpush2.msra.mxu0 0.0
        %387 = vmatprep.subr.mxu0 0.0
        %388 = vmatpush2.msra.mxu0 0.0
        %389 = vmatprep.subr.mxu0 0.0
        %390 = vmatpush2.msra.mxu0 0.0
        %391 = vmatprep.subr.mxu0 0.0
        %392 = vmatpush2.msra.mxu0 0.0
        %393 = vmatprep.subr.mxu0 0.0
        %394 = vmatpush2.msra.mxu0 0.0
        %395 = vmatprep.subr.mxu0 0.0
        %396 = vmatpush2.msra.mxu0 0.0
        %397 = vmatprep.subr.mxu0 0.0
        %398 = vmatpush2.msra.mxu0 0.0
        %399 = vmatprep.subr.mxu0 0.0
        %400 = vmatpush2.msra.mxu0 0.0
        %401 = vmatprep.mubr.f32.mxu0 0.0
        %402 = vmatmul.mubr.f32.gmra.mxu0 %v314
        %v403 = vpop.f32.mrf.mxu0
        %v404 = vadd.f32 %v310, %v403
        %v405 = vpop.f32.mrf.mxu0
        %406 = vmatprep.mubr.f32.mxu0 0.0
        %407 = vmatmul.mubr.f32.gmra.mxu0 %v317
        %v408 = vpop.f32.mrf.mxu0
        %v409 = vadd.f32 %v310, %v408
        %v410 = vpop.f32.mrf.mxu0
        %411 = vmatprep.mubr.f32.mxu0 0.0
        %412 = vmatmul.mubr.f32.gmra.mxu0 %v320
        %v413 = vpop.f32.mrf.mxu0
        %v414 = vadd.f32 %v310, %v413
        %v415 = vpop.f32.mrf.mxu0
        %416 = vmatprep.mubr.f32.mxu0 0.0
        %417 = vmatmul.mubr.f32.gmra.mxu0 %v323
        %v418 = vpop.f32.mrf.mxu0
        %v419 = vadd.f32 %v310, %v418
        %v420 = vpop.f32.mrf.mxu0
        %421 = vmatprep.mubr.f32.mxu0 0.0
        %422 = vmatmul.mubr.f32.gmra.mxu0 %v326
        %v423 = vpop.f32.mrf.mxu0
        %v424 = vadd.f32 %v310, %v423
        %v425 = vpop.f32.mrf.mxu0
        %426 = vmatprep.mubr.f32.mxu0 0.0
        %427 = vmatmul.mubr.f32.gmra.mxu0 %v329
        %v428 = vpop.f32.mrf.mxu0
        %v429 = vadd.f32 %v310, %v428
        %v430 = vpop.f32.mrf.mxu0
        %431 = vmatprep.mubr.f32.mxu0 0.0
        %432 = vmatmul.mubr.f32.gmra.mxu0 %v332
        %v433 = vpop.f32.mrf.mxu0
        %v434 = vadd.f32 %v310, %v433
        %v435 = vpop.f32.mrf.mxu0
        %436 = vmatprep.mubr.f32.mxu0 0.0
        %437 = vmatmul.mubr.f32.gmra.mxu0 %v335
        %v438 = vpop.f32.mrf.mxu0
        %v439 = vadd.f32 %v310, %v438
        %v440 = vpop.f32.mrf.mxu0
        %441 = vdwg.mxu0
        %v442 = vmax.f32 %v404, 0.0
        %v443 = vmax.f32 %v409, 0.0
        %v444 = vmax.f32 %v414, 0.0
        %v445 = vmax.f32 %v419, 0.0
        %v446 = vmax.f32 %v424, 0.0
        %v447 = vmax.f32 %v429, 0.0
        %v448 = vmax.f32 %v434, 0.0
        %v449 = vmax.f32 %v439, 0.0
        %v450 = vld [vmem:[%s3] sm:$0xff]
        %v451 = vld [vmem:[%s3 + $0x8] sm:$0xff]
        %v452 = vld [vmem:[%s3 + $0x10] sm:$0xff]
        %v453 = vld [vmem:[%s3 + $0x18] sm:$0xff]
        %v454 = vld [vmem:[%s3 + $0x20] sm:$0xff]
        %v455 = vld [vmem:[%s3 + $0x28] sm:$0xff]
        %v456 = vld [vmem:[%s3 + $0x30] sm:$0xff]
        %v457 = vld [vmem:[%s3 + $0x38] sm:$0xff]
        %v458 = vld [vmem:[%s3 + $0x40] sm:$0xff]
        %v459 = vld [vmem:[%s3 + $0x48] sm:$0xff]
        %v460 = vld [vmem:[%s3 + $0x50] sm:$0xff]
        %v461 = vld [vmem:[%s3 + $0x58] sm:$0xff]
        %v462 = vld [vmem:[%s3 + $0x60] sm:$0xff]
        %v463 = vld [vmem:[%s3 + $0x68] sm:$0xff]
        %v464 = vld [vmem:[%s3 + $0x70] sm:$0xff]
        %v465 = vld [vmem:[%s3 + $0x78] sm:$0xff]
        %v466 = vld [vmem:[%s4] sm:$0x1]
        %v468 = vlaneseq
        %v469 = vshrl.u32 %v468, 7
        %v470 = vsub.s32 0, %v469
        %v471 = vrot.slane %v466, %v470
        %473 = vmatprep.subr.mxu0 0.0
        %474 = vmatpush1.msra.mxu0 %v465
        %475 = vmatprep.subr.mxu0 0.0
        %476 = vmatpush1.msra.mxu0 %v464
        %477 = vmatprep.subr.mxu0 0.0
        %478 = vmatpush1.msra.mxu0 %v463
        %479 = vmatprep.subr.mxu0 0.0
        %480 = vmatpush1.msra.mxu0 %v462
        %481 = vmatprep.subr.mxu0 0.0
        %482 = vmatpush1.msra.mxu0 %v461
        %483 = vmatprep.subr.mxu0 0.0
        %484 = vmatpush1.msra.mxu0 %v460
        %485 = vmatprep.subr.mxu0 0.0
        %486 = vmatpush1.msra.mxu0 %v459
        %487 = vmatprep.subr.mxu0 0.0
        %488 = vmatpush1.msra.mxu0 %v458
        %489 = vmatprep.subr.mxu0 0.0
        %490 = vmatpush1.msra.mxu0 %v457
        %491 = vmatprep.subr.mxu0 0.0
        %492 = vmatpush1.msra.mxu0 %v456
        %493 = vmatprep.subr.mxu0 0.0
        %494 = vmatpush1.msra.mxu0 %v455
        %495 = vmatprep.subr.mxu0 0.0
        %496 = vmatpush1.msra.mxu0 %v454
        %497 = vmatprep.subr.mxu0 0.0
        %498 = vmatpush1.msra.mxu0 %v453
        %499 = vmatprep.subr.mxu0 0.0
        %500 = vmatpush1.msra.mxu0 %v452
        %501 = vmatprep.subr.mxu0 0.0
        %502 = vmatpush1.msra.mxu0 %v451
        %503 = vmatprep.subr.mxu0 0.0
        %504 = vmatpush1.msra.mxu0 %v450
        %505 = vmatprep.subr.mxu0 0.0
        %506 = vmatpush2.msra.mxu0 0.0
        %507 = vmatprep.subr.mxu0 0.0
        %508 = vmatpush2.msra.mxu0 0.0
        %509 = vmatprep.subr.mxu0 0.0
        %510 = vmatpush2.msra.mxu0 0.0
        %511 = vmatprep.subr.mxu0 0.0
        %512 = vmatpush2.msra.mxu0 0.0
        %513 = vmatprep.subr.mxu0 0.0
        %514 = vmatpush2.msra.mxu0 0.0
        %515 = vmatprep.subr.mxu0 0.0
        %516 = vmatpush2.msra.mxu0 0.0
        %517 = vmatprep.subr.mxu0 0.0
        %518 = vmatpush2.msra.mxu0 0.0
        %519 = vmatprep.subr.mxu0 0.0
        %520 = vmatpush2.msra.mxu0 0.0
        %521 = vmatprep.subr.mxu0 0.0
        %522 = vmatpush2.msra.mxu0 0.0
        %523 = vmatprep.subr.mxu0 0.0
        %524 = vmatpush2.msra.mxu0 0.0
        %525 = vmatprep.subr.mxu0 0.0
        %526 = vmatpush2.msra.mxu0 0.0
        %527 = vmatprep.subr.mxu0 0.0
        %528 = vmatpush2.msra.mxu0 0.0
        %529 = vmatprep.subr.mxu0 0.0
        %530 = vmatpush2.msra.mxu0 0.0
        %531 = vmatprep.subr.mxu0 0.0
        %532 = vmatpush2.msra.mxu0 0.0
        %533 = vmatprep.subr.mxu0 0.0
        %534 = vmatpush2.msra.mxu0 0.0
        %535 = vmatprep.subr.mxu0 0.0
        %536 = vmatpush2.msra.mxu0 0.0
        %537 = vmatprep.mubr.f32.mxu0 0.0
        %538 = vmatmul.mubr.f32.gmra.mxu0 %v442
        %v539 = vpop.f32.mrf.mxu0
        %v540 = vadd.f32 %v471, %v539
        %v541 = vpop.f32.mrf.mxu0
        %542 = vmatprep.mubr.f32.mxu0 0.0
        %543 = vmatmul.mubr.f32.gmra.mxu0 %v443
        %v544 = vpop.f32.mrf.mxu0
        %v545 = vadd.f32 %v471, %v544
        %v546 = vpop.f32.mrf.mxu0
        %547 = vmatprep.mubr.f32.mxu0 0.0
        %548 = vmatmul.mubr.f32.gmra.mxu0 %v444
        %v549 = vpop.f32.mrf.mxu0
        %v550 = vadd.f32 %v471, %v549
        %v551 = vpop.f32.mrf.mxu0
        %552 = vmatprep.mubr.f32.mxu0 0.0
        %553 = vmatmul.mubr.f32.gmra.mxu0 %v445
        %v554 = vpop.f32.mrf.mxu0
        %v555 = vadd.f32 %v471, %v554
        %v556 = vpop.f32.mrf.mxu0
        %557 = vmatprep.mubr.f32.mxu0 0.0
        %558 = vmatmul.mubr.f32.gmra.mxu0 %v446
        %v559 = vpop.f32.mrf.mxu0
        %v560 = vadd.f32 %v471, %v559
        %v561 = vpop.f32.mrf.mxu0
        %562 = vmatprep.mubr.f32.mxu0 0.0
        %563 = vmatmul.mubr.f32.gmra.mxu0 %v447
        %v564 = vpop.f32.mrf.mxu0
        %v565 = vadd.f32 %v471, %v564
        %v566 = vpop.f32.mrf.mxu0
        %567 = vmatprep.mubr.f32.mxu0 0.0
        %568 = vmatmul.mubr.f32.gmra.mxu0 %v448
        %v569 = vpop.f32.mrf.mxu0
        %v570 = vadd.f32 %v471, %v569
        %v571 = vpop.f32.mrf.mxu0
        %572 = vmatprep.mubr.f32.mxu0 0.0
        %573 = vmatmul.mubr.f32.gmra.mxu0 %v449
        %v574 = vpop.f32.mrf.mxu0
        %v575 = vadd.f32 %v471, %v574
        %v576 = vpop.f32.mrf.mxu0
        %577 = vdwg.mxu0
        %v578 = vmax.f32 %v540, 0.0
        %v579 = vmax.f32 %v545, 0.0
        %v580 = vmax.f32 %v550, 0.0
        %v581 = vmax.f32 %v555, 0.0
        %v582 = vmax.f32 %v560, 0.0
        %v583 = vmax.f32 %v565, 0.0
        %v584 = vmax.f32 %v570, 0.0
        %v585 = vmax.f32 %v575, 0.0
        %v586 = vld [vmem:[#allocation2] sm:$0xff]
        %v587 = vld [vmem:[#allocation2 + $0x8] sm:$0xff]
        %v588 = vld [vmem:[#allocation2 + $0x10] sm:$0xff]
        %v589 = vld [vmem:[#allocation2 + $0x18] sm:$0xff]
        %v590 = vld [vmem:[#allocation2 + $0x20] sm:$0xff]
        %v591 = vld [vmem:[#allocation2 + $0x28] sm:$0xff]
        %v592 = vld [vmem:[#allocation2 + $0x30] sm:$0xff]
        %v593 = vld [vmem:[#allocation2 + $0x38] sm:$0xff]
        %v594 = vld [vmem:[#allocation2 + $0x40] sm:$0xff]
        %v595 = vld [vmem:[#allocation2 + $0x48] sm:$0xff]
        %v596 = vld [vmem:[#allocation2 + $0x50] sm:$0xff]
        %v597 = vld [vmem:[#allocation2 + $0x58] sm:$0xff]
        %v598 = vld [vmem:[#allocation2 + $0x60] sm:$0xff]
        %v599 = vld [vmem:[#allocation2 + $0x68] sm:$0xff]
        %v600 = vld [vmem:[#allocation2 + $0x70] sm:$0xff]
        %v601 = vld [vmem:[#allocation2 + $0x78] sm:$0xff]
        %v602 = vld [vmem:[%s6] sm:$0x1]
        %v604 = vlaneseq
        %v605 = vshrl.u32 %v604, 7
        %v606 = vsub.s32 0, %v605
        %v607 = vrot.slane %v602, %v606
        %609 = vmatprep.subr.mxu0 0.0
        %610 = vmatpush1.msra.mxu0 %v601
        %611 = vmatprep.subr.mxu0 0.0
        %612 = vmatpush1.msra.mxu0 %v600
        %613 = vmatprep.subr.mxu0 0.0
        %614 = vmatpush1.msra.mxu0 %v599
        %615 = vmatprep.subr.mxu0 0.0
        %616 = vmatpush1.msra.mxu0 %v598
        %617 = vmatprep.subr.mxu0 0.0
        %618 = vmatpush1.msra.mxu0 %v597
        %619 = vmatprep.subr.mxu0 0.0
        %620 = vmatpush1.msra.mxu0 %v596
        %621 = vmatprep.subr.mxu0 0.0
        %622 = vmatpush1.msra.mxu0 %v595
        %623 = vmatprep.subr.mxu0 0.0
        %624 = vmatpush1.msra.mxu0 %v594
        %625 = vmatprep.subr.mxu0 0.0
        %626 = vmatpush1.msra.mxu0 %v593
        %627 = vmatprep.subr.mxu0 0.0
        %628 = vmatpush1.msra.mxu0 %v592
        %629 = vmatprep.subr.mxu0 0.0
        %630 = vmatpush1.msra.mxu0 %v591
        %631 = vmatprep.subr.mxu0 0.0
        %632 = vmatpush1.msra.mxu0 %v590
        %633 = vmatprep.subr.mxu0 0.0
        %634 = vmatpush1.msra.mxu0 %v589
        %635 = vmatprep.subr.mxu0 0.0
        %636 = vmatpush1.msra.mxu0 %v588
        %637 = vmatprep.subr.mxu0 0.0
        %638 = vmatpush1.msra.mxu0 %v587
        %639 = vmatprep.subr.mxu0 0.0
        %640 = vmatpush1.msra.mxu0 %v586
        %641 = vmatprep.subr.mxu0 0.0
        %642 = vmatpush2.msra.mxu0 0.0
        %643 = vmatprep.subr.mxu0 0.0
        %644 = vmatpush2.msra.mxu0 0.0
        %645 = vmatprep.subr.mxu0 0.0
        %646 = vmatpush2.msra.mxu0 0.0
        %647 = vmatprep.subr.mxu0 0.0
        %648 = vmatpush2.msra.mxu0 0.0
        %649 = vmatprep.subr.mxu0 0.0
        %650 = vmatpush2.msra.mxu0 0.0
        %651 = vmatprep.subr.mxu0 0.0
        %652 = vmatpush2.msra.mxu0 0.0
        %653 = vmatprep.subr.mxu0 0.0
        %654 = vmatpush2.msra.mxu0 0.0
        %655 = vmatprep.subr.mxu0 0.0
        %656 = vmatpush2.msra.mxu0 0.0
        %657 = vmatprep.subr.mxu0 0.0
        %658 = vmatpush2.msra.mxu0 0.0
        %659 = vmatprep.subr.mxu0 0.0
        %660 = vmatpush2.msra.mxu0 0.0
        %661 = vmatprep.subr.mxu0 0.0
        %662 = vmatpush2.msra.mxu0 0.0
        %663 = vmatprep.subr.mxu0 0.0
        %664 = vmatpush2.msra.mxu0 0.0
        %665 = vmatprep.subr.mxu0 0.0
        %666 = vmatpush2.msra.mxu0 0.0
        %667 = vmatprep.subr.mxu0 0.0
        %668 = vmatpush2.msra.mxu0 0.0
        %669 = vmatprep.subr.mxu0 0.0
        %670 = vmatpush2.msra.mxu0 0.0
        %671 = vmatprep.subr.mxu0 0.0
        %672 = vmatpush2.msra.mxu0 0.0
        %673 = vmatprep.mubr.f32.mxu0 0.0
        %674 = vmatmul.mubr.f32.gmra.mxu0 %v578
        %v675 = vpop.f32.mrf.mxu0
        %v676 = vadd.f32 %v607, %v675
        %v677 = vpop.f32.mrf.mxu0
        %678 = vmatprep.mubr.f32.mxu0 0.0
        %679 = vmatmul.mubr.f32.gmra.mxu0 %v579
        %v680 = vpop.f32.mrf.mxu0
        %v681 = vadd.f32 %v607, %v680
        %v682 = vpop.f32.mrf.mxu0
        %683 = vmatprep.mubr.f32.mxu0 0.0
        %684 = vmatmul.mubr.f32.gmra.mxu0 %v580
        %v685 = vpop.f32.mrf.mxu0
        %v686 = vadd.f32 %v607, %v685
        %v687 = vpop.f32.mrf.mxu0
        %688 = vmatprep.mubr.f32.mxu0 0.0
        %689 = vmatmul.mubr.f32.gmra.mxu0 %v581
        %v690 = vpop.f32.mrf.mxu0
        %v691 = vadd.f32 %v607, %v690
        %v692 = vpop.f32.mrf.mxu0
        %693 = vmatprep.mubr.f32.mxu0 0.0
        %694 = vmatmul.mubr.f32.gmra.mxu0 %v582
        %v695 = vpop.f32.mrf.mxu0
        %v696 = vadd.f32 %v607, %v695
        %v697 = vpop.f32.mrf.mxu0
        %698 = vmatprep.mubr.f32.mxu0 0.0
        %699 = vmatmul.mubr.f32.gmra.mxu0 %v583
        %v700 = vpop.f32.mrf.mxu0
        %v701 = vadd.f32 %v607, %v700
        %v702 = vpop.f32.mrf.mxu0
        %703 = vmatprep.mubr.f32.mxu0 0.0
        %704 = vmatmul.mubr.f32.gmra.mxu0 %v584
        %v705 = vpop.f32.mrf.mxu0
        %v706 = vadd.f32 %v607, %v705
        %v707 = vpop.f32.mrf.mxu0
        %708 = vmatprep.mubr.f32.mxu0 0.0
        %709 = vmatmul.mubr.f32.gmra.mxu0 %v585
        %v710 = vpop.f32.mrf.mxu0
        %v711 = vadd.f32 %v607, %v710
        %v712 = vpop.f32.mrf.mxu0
        %713 = vdwg.mxu0
        %714 = vst [vmem:[%s287] sm:$0xff] %v676
        %715 = vst [vmem:[%s287 + $0x8] sm:$0xff] %v681
        %716 = vst [vmem:[%s287 + $0x10] sm:$0xff] %v686
        %717 = vst [vmem:[%s287 + $0x18] sm:$0xff] %v691
        %718 = vst [vmem:[%s287 + $0x20] sm:$0xff] %v696
        %719 = vst [vmem:[%s287 + $0x28] sm:$0xff] %v701
        %720 = vst [vmem:[%s287 + $0x30] sm:$0xff] %v706
        %721 = vst [vmem:[%s287 + $0x38] sm:$0xff] %v711
        %s722 = sand.u32 %s182, 1
        %s723 = scalar_lea.sflag [#allocation4], %s722
        %s724 = sand.u32 %s182, 1
        %s725 = smul.addr %s724, 64
        %s726 = scalar_lea.vmem [#allocation5], %s725
        // Predicated region
        $region53: #{tpu_custom_call.1} parent=47 // pred_check
          %p727 = pneg %p192
        $region54: #{tpu_custom_call.1} parent=47 // pred_check_branch
          %729 = sbr.rel (%p727) target = $region56
        $region55: #{tpu_custom_call.1} parent=47 // pred_region
          %s730 = smul.u32 8, %s22
          %s732 = ssub.s32 1024, 1024
          %733 = vsyncadd %s723, %s732
          %s734 = smul.addr %s730, 128
          %s735 = scalar_lea.hbm %s7, %s734
          %s736 = sshll.u32 %s726, 4
          %s737 = int_to_ptr.vmem [resolvable:$true] %s736
          %742 = dma.vmem_to_hbm [thread:$0]  %s737, 1024, %s735, %s723, 128, 128, 8
        $region56: #{tpu_custom_call.1} parent=47 // pred_fallthru
          _
      $region48: #{tpu_custom_call.1} parent=5 // pred_fallthru
        _
      %p743 = scmp.le.s32.totalorder 2, %s17
      // Predicated region
      $region57: #{tpu_custom_call.1} parent=5 // pred_check
        %p744 = pneg %p743
      $region58: #{tpu_custom_call.1} parent=5 // pred_check_branch
        %746 = sbr.rel (%p744) target = $region60
      $region59: #{tpu_custom_call.1} parent=5 // pred_region
        %s747 = ssub.s32 %s17, 2
        // Predicated region
        $region61: #{tpu_custom_call.1} parent=59 // pred_check
          %p748 = pneg %p198
        $region62: #{tpu_custom_call.1} parent=59 // pred_check_branch
          %750 = sbr.rel (%p748) target = $region64
        $region63: #{tpu_custom_call.1} parent=59 // pred_region
          %s751 = sand.u32 %s183, 1
          %s752 = scalar_lea.sflag [#allocation4], %s751
          %s753 = sand.u32 %s183, 1
          %s754 = smul.addr %s753, 64
          %s755 = scalar_lea.vmem [#allocation5], %s754
          %756 = dma.done %s752, 1024
        $region64: #{tpu_custom_call.1} parent=59 // pred_fallthru
          _
      $region60: #{tpu_custom_call.1} parent=5 // pred_fallthru
        _
    $region6: #{tpu_custom_call.1} parent=1 // loop_footer
      %s21 = sadd.s32 1, %s17
    $region7: #{tpu_custom_call.1} parent=1 // loop_footer_branch
      %16 = sbr.rel target = $region3
    $region8: #{tpu_custom_call.1} parent=1 // loop_exit
      _
    %757 = vsyncpa [#allocation3], 1
    %s758 = scalar_lea.sflag [#allocation3], 1
    %759 = vsyncpa %s758, 1
    %760 = vsyncpa [#allocation4], 1
    %s761 = scalar_lea.sflag [#allocation4], 1
    %762 = vsyncpa %s761, 1

</llo_original>
